<compile_context>
chip_gen: v7x
topology: tpu7x:2x2x1
jax: 0.10.0
libtpu: 0.0.40
codegen_flags: <defaults>
</compile_context>

<pallas_src>
import math
import functools

import jax
import jax.numpy as jnp
from jax import lax
from jax.experimental import pallas as pl
from jax.experimental.pallas import tpu as pltpu


def _normalize_rows_f32(v):
    """F.normalize semantics: v / max(||v||, 1e-12) == v * rsqrt(max(sum v^2, 1e-24))."""
    v32 = v.astype(jnp.float32)
    inv = lax.rsqrt(jnp.maximum(jnp.sum(v32 * v32, axis=-1, keepdims=True), 1e-24))
    return v32 * inv


def _cosine_logits(xn_ref, w_ref):
    """xn_ref: (B, F) bf16 pre-normalized rows.  w_ref: (TN, F) raw W tile.

    Returns (B, TN) f32 cosine logits, normalizing the W tile in-register and
    contracting the last dims on the MXU (no transpose materialized).
    """
    wn = _normalize_rows_f32(w_ref[...]).astype(jnp.bfloat16)
    return lax.dot_general(
        xn_ref[...], wn,
        dimension_numbers=(((1,), (1,)), ((), ())),
        preferred_element_type=jnp.float32,
    )


def _logits_kernel(xn_ref, w_ref, out_ref):
    out_ref[...] = _cosine_logits(xn_ref, w_ref).astype(out_ref.dtype)


def _margin_kernel(lab_ref, xn_ref, w_ref, out_ref, *, s, m, block_n):
    logits = _cosine_logits(xn_ref, w_ref)                       # (B, TN) f32

    clamped = jnp.clip(logits, -1.0 + 1e-07, 1.0 - 1e-07)
    cos_m = jnp.float32(math.cos(m))
    sin_m = jnp.float32(math.sin(m))
    # cos(acos(c) + m) = c*cos(m) - sqrt(1 - c^2)*sin(m)
    target = clamped * cos_m - jnp.sqrt(1.0 - clamped * clamped) * sin_m

    b, tn = logits.shape
    col = lax.broadcasted_iota(jnp.int32, (b, tn), 1) + pl.program_id(0) * block_n
    lab = lab_ref[...]                                           # (B, 1) int32
    out = jnp.where(col == lab, target, logits)
    out_ref[...] = (out * jnp.float32(s)).astype(out_ref.dtype)


def _choose_class_tile(C, F, B, w_itemsize, out_itemsize, block_n):
    """Pick the class-tile width TN: lane-aligned, VMEM-budgeted, >=2 tiles if possible."""
    tn = min(block_n, C)
    if C < 128:
        return tn                                   # full class dim, single tile
    tn = max(128, (tn // 128) * 128)

    # Keep the per-step working set (double-buffered W tile + output tile)
    # under ~40 MiB so it is comfortable inside v7x's 64 MiB VMEM per core.
    budget = 40 * 2 ** 20
    def tile_bytes(t):
        return 2 * t * F * w_itemsize + 2 * B * t * out_itemsize
    while tn > 128 and tile_bytes(tn) > budget:
        tn -= 128

    # Prefer >= 2 class tiles so the "parallel" grid axis feeds both v7x cores.
    if tn >= C and C > 128:
        tn = max(128, ((C // 2 + 127) // 128) * 128)
    return tn


def dynaam_forward(x, W, labels=None, *, s=30.0, m=0.5, block_n=1024,
                   out_dtype=jnp.float32, w_buffers=2):
    """DynAAM forward.

    x: (B, F) float, W: (C, F) float (bf16 storage recommended),
    labels: (B,) int class ids or None.
    Returns (B, C) cosine logits if labels is None, otherwise the (B, C)
    margin-applied, s-scaled output (matching the PyTorch module).
    """
    B, F = x.shape
    C, Fw = W.shape
    assert F == Fw

    w_isz = jnp.dtype(W.dtype).itemsize
    x_isz = jnp.dtype(x.dtype).itemsize
    o_isz = jnp.dtype(out_dtype).itemsize

    tn = _choose_class_tile(C, F, B, w_isz, o_isz, block_n)
    grid = (pl.cdiv(C, tn),)

    # Hoisted: normalize x once in the wrapper (tiny B*F op, amortized over all
    # class tiles); the kernel consumes it directly as bf16 MXU operand.
    xn = _normalize_rows_f32(x).astype(jnp.bfloat16)

    x_spec = pl.BlockSpec((B, F), lambda j: (0, 0))     # resident across class tiles
    w_kwargs = {}
    if w_buffers != 2:
        w_kwargs["pipeline_mode"] = pl.Buffered(w_buffers)
    w_spec = pl.BlockSpec((tn, F), lambda j: (j, 0), **w_kwargs)   # streamed
    o_spec = pl.BlockSpec((B, tn), lambda j: (0, j))               # lane-dense output

    # Explicit VMEM budget (covers v5e's 16 MiB default scoped limit; stays
    # well under v7x's 64 MiB physical VMEM thanks to the tile auto-fit above).
    x_bytes = 2 * B * F * 2                      # bf16 resident x (double-buffered)
    w_bytes = max(w_buffers, 2) * tn * F * w_isz
    o_bytes = 2 * B * tn * o_isz
    lab_bytes = 2 * B * 128 * 4                  # padded (B, 1) int32 tile
    vmem_limit = int(min(100 * 2 ** 20,
                         max(32 * 2 ** 20,
                             2 * (x_bytes + w_bytes + o_bytes + lab_bytes))))
    cparams = pltpu.CompilerParams(
        dimension_semantics=("parallel",),
        vmem_limit_bytes=vmem_limit,
    )

    cost = pl.CostEstimate(
        flops=2 * B * C * F,
        transcendentals=B * C + C,               # per-class sqrt + per-row rsqrt
        bytes_accessed=C * F * w_isz + B * F * x_isz + B * C * o_isz,
    )

    if labels is None:
        return pl.pallas_call(
            _logits_kernel,
            out_shape=jax.ShapeDtypeStruct((B, C), out_dtype),
            grid=grid,
            in_specs=[x_spec, w_spec],
            out_specs=o_spec,
            compiler_params=cparams,
            cost_estimate=cost,
        )(xn, W)

    lab = jnp.asarray(labels, jnp.int32).reshape(B, 1)
    kernel = functools.partial(_margin_kernel, s=s, m=m, block_n=tn)
    return pl.pallas_call(
        kernel,
        out_shape=jax.ShapeDtypeStruct((B, C), out_dtype),
        grid=grid,
        in_specs=[
            pl.BlockSpec((B, 1), lambda j: (0, 0)),      # tiny int32 labels
            x_spec,
            w_spec,
        ],
        out_specs=o_spec,
        compiler_params=cparams,
        cost_estimate=cost,
    )(lab, xn, W)


def _reference(x, W, labels, s=30.0, m=0.5):
    # Pure-JAX (f32) reference mirroring the PyTorch module.
    x = x.astype(jnp.float32)
    W = W.astype(jnp.float32)
    xn = x / jnp.maximum(jnp.linalg.norm(x, axis=-1, keepdims=True), 1e-12)
    wn = W / jnp.maximum(jnp.linalg.norm(W, axis=-1, keepdims=True), 1e-12)
    logits = xn @ wn.T
    one_hot = jax.nn.one_hot(labels, W.shape[0], dtype=jnp.float32)
    theta = jnp.arccos(jnp.clip(logits, -1.0 + 1e-07, 1.0 - 1e-07))
    target = jnp.cos(theta + m)
    out = (logits * (1 - one_hot) + target * one_hot) * s
    return logits, out


if __name__ == "__main__":
    num_features = 64
    num_classes = 512
    batch = 8
    block_n = 256        # exercises a 2-step "parallel" class-tile grid

    key = jax.random.PRNGKey(0)
    kx, kw, kl = jax.random.split(key, 3)

    # Deterministic Xavier-uniform init for W (num_classes, num_features),
    # stored in bf16 (the recommended param storage dtype for this kernel).
    bound = math.sqrt(6.0 / (num_classes + num_features))
    W = jax.random.uniform(
        kw, (num_classes, num_features), jnp.float32, minval=-bound, maxval=bound
    ).astype(jnp.bfloat16)
    x = jax.random.normal(kx, (batch, num_features), jnp.float32)
    labels = jax.random.randint(kl, (batch,), 0, num_classes)

    # Label-less path -> cosine logits.
    logits = dynaam_forward(x, W, None, s=30.0, m=0.5, block_n=block_n)
    # Labelled path -> margin-applied, scaled output.
    out = dynaam_forward(x, W, labels, s=30.0, m=0.5, block_n=block_n)
    logits = jax.block_until_ready(logits)
    out = jax.block_until_ready(out)

    ref_logits, ref_out = _reference(x, W, labels)
    # bf16 MXU operands with f32 accumulation -> loosen tolerances vs f32 ref.
    assert jnp.allclose(logits, ref_logits, atol=2e-2), (
        float(jnp.max(jnp.abs(logits - ref_logits))))
    assert jnp.allclose(out, ref_out, atol=0.6), (
        float(jnp.max(jnp.abs(out - ref_out))))

    print("KERNEL_OK")
</pallas_src>

<mosaic_0001>
module attributes {stable_mosaic.version = 11 : i64} {
  func.func @_logits_kernel(%arg0: i32, %arg1: memref<8x64xbf16, #tpu.memory_space<vmem>>, %arg2: memref<256x64xbf16, #tpu.memory_space<vmem>>, %arg3: memref<8x256xf32, #tpu.memory_space<vmem>>) attributes {dimension_semantics = [#tpu.dimension_semantics<parallel>], iteration_bounds = array<i64: 2>, scalar_prefetch = 0 : i64, scratch_operands = 0 : i64, tpu.core_type = #tpu.core_type<tc>, window_params = [{pipeline_mode = #tpu.pipeline_mode<synchronous>, transform_indices = @transform_0, window_bounds = array<i64: 8, 64>}, {transform_indices = @transform_1, window_bounds = array<i64: 256, 64>}, {transform_indices = @transform_2, window_bounds = array<i64: 8, 256>}]} {
    %c0 = arith.constant 0 : index
    %c0_0 = arith.constant 0 : index
    %0 = vector.load %arg2[%c0, %c0_0] : memref<256x64xbf16, #tpu.memory_space<vmem>>, vector<256x64xbf16>
    %1 = arith.extf %0 : vector<256x64xbf16> to vector<256x64xf32>
    %2 = arith.mulf %1, %1 : vector<256x64xf32>
    %cst = arith.constant dense<0.000000e+00> : vector<256xf32>
    %3 = vector.multi_reduction <add>, %2, %cst [1] : vector<256x64xf32> to vector<256xf32>
    %4 = vector.shape_cast %3 : vector<256xf32> to vector<256x1xf32>
    %cst_1 = arith.constant 1.000000e-24 : f32
    %5 = vector.broadcast %cst_1 : f32 to vector<256x1xf32>
    %6 = arith.maximumf %4, %5 : vector<256x1xf32>
    %7 = math.rsqrt %6 : vector<256x1xf32>
    %8 = vector.broadcast %7 : vector<256x1xf32> to vector<256x64xf32>
    %9 = arith.mulf %1, %8 : vector<256x64xf32>
    %10 = arith.truncf %9 : vector<256x64xf32> to vector<256x64xbf16>
    %c0_2 = arith.constant 0 : index
    %c0_3 = arith.constant 0 : index
    %11 = vector.load %arg1[%c0_2, %c0_3] : memref<8x64xbf16, #tpu.memory_space<vmem>>, vector<8x64xbf16>
    %cst_4 = arith.constant dense<0.000000e+00> : vector<8x256xf32>
    %12 = tpu.matmul %11, %10, %cst_4 {dimension_numbers = #tpu.dot_dimension_numbers<[1], [1], [0], [0], [0, 0, 1, 0], [], []>} : vector<8x64xbf16>, vector<256x64xbf16>, vector<8x256xf32> -> vector<8x256xf32>
    %c0_5 = arith.constant 0 : index
    %c0_6 = arith.constant 0 : index
    %13 = vector.load %arg3[%c0_5, %c0_6] : memref<8x256xf32, #tpu.memory_space<vmem>>, vector<8x256xf32>
    tpu.vector_store %arg3[%c0_5, %c0_6], %12 {strides = array<i32>} : memref<8x256xf32, #tpu.memory_space<vmem>>, vector<8x256xf32>,
    return
  }
  func.func @transform_0(%arg0: i32) -> (i32, i32) {
    %c0_i32 = arith.constant 0 : i32
    %c0_i32_0 = arith.constant 0 : i32
    %c0_i32_1 = arith.constant 0 : i32
    return %c0_i32, %c0_i32_0 : i32, i32
  }
  func.func @transform_1(%arg0: i32) -> (i32, i32) {
    %c0_i32 = arith.constant 0 : i32
    %c0_i32_0 = arith.constant 0 : i32
    return %arg0, %c0_i32 : i32, i32
  }
  func.func @transform_2(%arg0: i32) -> (i32, i32) {
    %c0_i32 = arith.constant 0 : i32
    %c0_i32_0 = arith.constant 0 : i32
    return %c0_i32, %arg0 : i32, i32
  }
}

</mosaic_0001>

<llo_original>
// kernel: tpu_custom_call.1
$region0: #{tpu_custom_call.1}
  #allocation0 [shape = 'u32[]', space=smem, size = 0x4, offset = 0x4, fixed_abs, tag = 'smem constant byte address 0x4 - core index']
  #allocation1 [shape = 'u32[144,128]{1,0:T(1,128)}', space=vmem, size = 0x12000, scoped, tag = 'internal scratch']
  %s0 = inlined_call_operand.vmem [shape: bf16[8,64], index: 0, kind: input, shape index: {}]
  %s1 = inlined_call_operand.vmem [shape: bf16[512,64], index: 1, kind: input, shape index: {}]
  %s2 = inlined_call_operand.hbm [shape: f32[8,512], index: 2, kind: output, shape index: {}]
  %s3 = sld [smem:[#allocation0]]
  $region41: #{tpu_custom_call.1} parent=0
    _
  %s5 = ssub.s32 1, %s3
  %s6 = scalar_select 0, %s5, %s3
  $region1: #{tpu_custom_call.1} parent=0
    #allocation2 [shape = 'u8[16384]{0}', space=vmem, size = 0x4000, scoped, tag = 'output window, operand 0']
    #allocation3 [shape = 's32[2]{0}', space=sflag, size = 0x8, scoped, tag = 'scoped memory for tpu_custom_call.1']
    %7 = vsyncpa [#allocation3], 0
    %s8 = scalar_lea.sflag [#allocation3], 1
    %9 = vsyncpa %s8, 0
    loop: start=0, step=1, limit=4
    $region2: #{tpu_custom_call.1} parent=1 // loop_pre_header
      _
    $region3: #{tpu_custom_call.1} parent=1 // loop_header
      %s11 = sphi 0, %s15
      %p12 = scmp.ge.s32.totalorder %s11, 4
      %s19 = sphi 0, %s19
      %s21 = sphi 0, %s19
      %s22 = sphi 0, %s21
      %s36 = sphi 0, %s22
      %s42 = sphi 0, %s44
      %s45 = sphi 0, %s42
      %s46 = sphi 0, %s45
      %s62 = sphi 0, %s46
      %s68 = sphi 0, %s70
      %s71 = sphi 0, %s68
      %s72 = sphi 0, %s71
      %s88 = sphi 0, %s72
    $region4: #{tpu_custom_call.1} parent=1 // loop_header_branch
      %14 = sbr.rel (%p12) target = $region8
    $region5: #{tpu_custom_call.1} parent=1 // loop_body
      %s16 = ssub.s32 %s11, 1
      %s17 = ssub.s32 %s11, 2
      %s18 = sadd.s32 %s11, 1
      %s20 = sadd.s32 %s19, 1
      %p23 = scmp.eq.s32.totalorder %s11, 1
      %p24 = scmp.ne.s32.totalorder %s19, %s21
      %p25 = scmp.eq.s32.totalorder %s11, 0
      %p26 = por %p24, %p25
      %p27 = scmp.ne.s32.totalorder %s19, %s21
      %p28 = scmp.eq.s32.totalorder %s16, 1
      %p29 = por %p27, %p28
      %p30 = scmp.ne.s32.totalorder %s21, %s22
      %p31 = scmp.eq.s32.totalorder %s16, 0
      %p32 = por %p30, %p31
      %p33 = scmp.ne.s32.totalorder %s21, %s22
      %p34 = scmp.eq.s32.totalorder %s17, 1
      %p35 = por %p33, %p34
      %p37 = scmp.ne.s32.totalorder %s22, %s36
      %p38 = scmp.eq.s32.totalorder %s17, 0
      %p39 = por %p37, %p38
      %s40 = ssub.s32 %s11, %s18
      %p41 = scmp.eq.s32.totalorder %s40, 0
      %s43 = sadd.s32 %s42, 1
      %s44 = scalar_select %p41, %s42, %s43
      %p47 = pneg %p41
      %p48 = scmp.eq.s32.totalorder %s11, 1
      %p49 = por %p47, %p48
      %p50 = scmp.ne.s32.totalorder %s42, %s45
      %p51 = scmp.eq.s32.totalorder %s11, 0
      %p52 = por %p50, %p51
      %p53 = scmp.ne.s32.totalorder %s42, %s45
      %p54 = scmp.eq.s32.totalorder %s16, 1
      %p55 = por %p53, %p54
      %p56 = scmp.ne.s32.totalorder %s45, %s46
      %p57 = scmp.eq.s32.totalorder %s16, 0
      %p58 = por %p56, %p57
      %p59 = scmp.ne.s32.totalorder %s45, %s46
      %p60 = scmp.eq.s32.totalorder %s17, 1
      %p61 = por %p59, %p60
      %p63 = scmp.ne.s32.totalorder %s46, %s62
      %p64 = scmp.eq.s32.totalorder %s17, 0
      %p65 = por %p63, %p64
      %s66 = ssub.s32 %s11, %s18
      %p67 = scmp.eq.s32.totalorder %s66, 0
      %s69 = sadd.s32 %s68, 1
      %s70 = scalar_select %p67, %s68, %s69
      %p73 = pneg %p67
      %p74 = scmp.eq.s32.totalorder %s11, 1
      %p75 = por %p73, %p74
      %p76 = scmp.ne.s32.totalorder %s68, %s71
      %p77 = scmp.eq.s32.totalorder %s11, 0
      %p78 = por %p76, %p77
      %p79 = scmp.ne.s32.totalorder %s68, %s71
      %p80 = scmp.eq.s32.totalorder %s16, 1
      %p81 = por %p79, %p80
      %p82 = scmp.ne.s32.totalorder %s71, %s72
      %p83 = scmp.eq.s32.totalorder %s16, 0
      %p84 = por %p82, %p83
      %p85 = scmp.ne.s32.totalorder %s71, %s72
      %p86 = scmp.eq.s32.totalorder %s17, 1
      %p87 = por %p85, %p86
      %p89 = scmp.ne.s32.totalorder %s72, %s88
      %p90 = scmp.eq.s32.totalorder %s17, 0
      %p91 = por %p89, %p90
      %p92 = scmp.le.s32.totalorder 1, %s11
      %p93 = scmp.lt.s32.totalorder %s11, 3
      %p94 = pnand %p92, %p93
      %p95 = pneg %p94
      // Predicated region
      $region9: #{tpu_custom_call.1} parent=5 // pred_check
        _
      $region10: #{tpu_custom_call.1} parent=5 // pred_check_branch
        %97 = sbr.rel (%p94) target = $region12
      $region11: #{tpu_custom_call.1} parent=5 // pred_region
        %s98 = ssub.s32 %s11, 1
        // Predicated region
        $region13: #{tpu_custom_call.1} parent=11 // pred_check
          %p99 = pneg %p32
        $region14: #{tpu_custom_call.1} parent=11 // pred_check_branch
          %101 = sbr.rel (%p99) target = $region16
        $region15: #{tpu_custom_call.1} parent=11 // pred_region
          _
        $region16: #{tpu_custom_call.1} parent=11 // pred_fallthru
          _
      $region12: #{tpu_custom_call.1} parent=5 // pred_fallthru
        _
      %p102 = scmp.lt.s32.totalorder %s11, 2
      // Predicated region
      $region17: #{tpu_custom_call.1} parent=5 // pred_check
        %p103 = pneg %p102
      $region18: #{tpu_custom_call.1} parent=5 // pred_check_branch
        %105 = sbr.rel (%p103) target = $region20
      $region19: #{tpu_custom_call.1} parent=5 // pred_region
        // Predicated region
        $region21: #{tpu_custom_call.1} parent=19 // pred_check
          %p106 = pneg %p52
        $region22: #{tpu_custom_call.1} parent=19 // pred_check_branch
          %108 = sbr.rel (%p106) target = $region24
        $region23: #{tpu_custom_call.1} parent=19 // pred_region
          %s109 = smul.u32 32, %s11
          %p110 = scmp.lt.s32.totalorder %s109, 63
          %s111 = scalar_select %p110, %s109, 63
          %s112 = smul.addr %s111, 4
          %s113 = scalar_lea.vmem %s1, %s112
          %s114 = smul.u32 32, %s11
        $region24: #{tpu_custom_call.1} parent=19 // pred_fallthru
          _
      $region20: #{tpu_custom_call.1} parent=5 // pred_fallthru
        _
      %p115 = scmp.le.s32.totalorder 1, %s11
      %p116 = scmp.lt.s32.totalorder %s11, 3
      %p117 = pnand %p115, %p116
      %p118 = pneg %p117
      // Predicated region
      $region25: #{tpu_custom_call.1} parent=5 // pred_check
        _
      $region26: #{tpu_custom_call.1} parent=5 // pred_check_branch
        %120 = sbr.rel (%p117) target = $region28
      $region27: #{tpu_custom_call.1} parent=5 // pred_region
        %s121 = ssub.s32 %s11, 1
        %p122 = pneg %p32
        %p123 = pneg %p29
        %s124 = smul.u32 32, %s16
        %p125 = scmp.lt.s32.totalorder %s124, 63
        %s126 = scalar_select %p125, %s124, 63
        %s127 = smul.addr %s126, 4
        %s128 = scalar_lea.vmem %s1, %s127
        %p129 = pneg %p58
        %p130 = pneg %p55
        %p131 = pneg %p84
        %p132 = pneg %p81
        %s133 = sand.u32 %s71, 1
        %s134 = scalar_lea.sflag [#allocation3], %s133
        %s135 = sand.u32 %s71, 1
        %s136 = smul.addr %s135, 16
        %s137 = scalar_lea.vmem [#allocation2], %s136
        %s138 = smul.u32 32, %s16
        %p139 = scmp.lt.s32.totalorder %s138, 63
        %s140 = scalar_select %p139, %s138, 63
        %s141 = smul.addr %s140, 4
        %s142 = scalar_lea.vmem %s1, %s141
        %s143 = smul.u32 32, %s16
        %s144 = smul.u32 2, %s16
        %v146 = vld [vmem:[%s142] sm:$0xf]
        %v147 = vld [vmem:[%s142 + $0x4] sm:$0xf]
        %v148 = vld [vmem:[%s142 + $0x8] sm:$0xf]
        %v149 = vld [vmem:[%s142 + $0xc] sm:$0xf]
        %v150 = vld [vmem:[%s142 + $0x10] sm:$0xf]
        %v151 = vld [vmem:[%s142 + $0x14] sm:$0xf]
        %v152 = vld [vmem:[%s142 + $0x18] sm:$0xf]
        %v153 = vld [vmem:[%s142 + $0x1c] sm:$0xf]
        %v154 = vld [vmem:[%s142 + $0x20] sm:$0xf]
        %v155 = vld [vmem:[%s142 + $0x24] sm:$0xf]
        %v156 = vld [vmem:[%s142 + $0x28] sm:$0xf]
        %v157 = vld [vmem:[%s142 + $0x2c] sm:$0xf]
        %v158 = vld [vmem:[%s142 + $0x30] sm:$0xf]
        %v159 = vld [vmem:[%s142 + $0x34] sm:$0xf]
        %v160 = vld [vmem:[%s142 + $0x38] sm:$0xf]
        %v161 = vld [vmem:[%s142 + $0x3c] sm:$0xf]
        %v162 = vld [vmem:[%s142 + $0x40] sm:$0xf]
        %v163 = vld [vmem:[%s142 + $0x44] sm:$0xf]
        %v164 = vld [vmem:[%s142 + $0x48] sm:$0xf]
        %v165 = vld [vmem:[%s142 + $0x4c] sm:$0xf]
        %v166 = vld [vmem:[%s142 + $0x50] sm:$0xf]
        %v167 = vld [vmem:[%s142 + $0x54] sm:$0xf]
        %v168 = vld [vmem:[%s142 + $0x58] sm:$0xf]
        %v169 = vld [vmem:[%s142 + $0x5c] sm:$0xf]
        %v170 = vld [vmem:[%s142 + $0x60] sm:$0xf]
        %v171 = vld [vmem:[%s142 + $0x64] sm:$0xf]
        %v172 = vld [vmem:[%s142 + $0x68] sm:$0xf]
        %v173 = vld [vmem:[%s142 + $0x6c] sm:$0xf]
        %v174 = vld [vmem:[%s142 + $0x70] sm:$0xf]
        %v175 = vld [vmem:[%s142 + $0x74] sm:$0xf]
        %v176 = vld [vmem:[%s142 + $0x78] sm:$0xf]
        %v177 = vld [vmem:[%s142 + $0x7c] sm:$0xf]
        %v178 = vunpack.c.l.bf16 %v146
        %v179 = vunpack.c.l.bf16 %v147
        %v180 = vunpack.c.l.bf16 %v148
        %v181 = vunpack.c.l.bf16 %v149
        %v182 = vunpack.c.l.bf16 %v150
        %v183 = vunpack.c.l.bf16 %v151
        %v184 = vunpack.c.l.bf16 %v152
        %v185 = vunpack.c.l.bf16 %v153
        %v186 = vunpack.c.l.bf16 %v154
        %v187 = vunpack.c.l.bf16 %v155
        %v188 = vunpack.c.l.bf16 %v156
        %v189 = vunpack.c.l.bf16 %v157
        %v190 = vunpack.c.l.bf16 %v158
        %v191 = vunpack.c.l.bf16 %v159
        %v192 = vunpack.c.l.bf16 %v160
        %v193 = vunpack.c.l.bf16 %v161
        %v194 = vunpack.c.l.bf16 %v162
        %v195 = vunpack.c.l.bf16 %v163
        %v196 = vunpack.c.l.bf16 %v164
        %v197 = vunpack.c.l.bf16 %v165
        %v198 = vunpack.c.l.bf16 %v166
        %v199 = vunpack.c.l.bf16 %v167
        %v200 = vunpack.c.l.bf16 %v168
        %v201 = vunpack.c.l.bf16 %v169
        %v202 = vunpack.c.l.bf16 %v170
        %v203 = vunpack.c.l.bf16 %v171
        %v204 = vunpack.c.l.bf16 %v172
        %v205 = vunpack.c.l.bf16 %v173
        %v206 = vunpack.c.l.bf16 %v174
        %v207 = vunpack.c.l.bf16 %v175
        %v208 = vunpack.c.l.bf16 %v176
        %v209 = vunpack.c.l.bf16 %v177
        %v210 = vmul.f32 %v178, %v178
        %v211 = vmul.f32 %v179, %v179
        %v212 = vmul.f32 %v180, %v180
        %v213 = vmul.f32 %v181, %v181
        %v214 = vmul.f32 %v182, %v182
        %v215 = vmul.f32 %v183, %v183
        %v216 = vmul.f32 %v184, %v184
        %v217 = vmul.f32 %v185, %v185
        %v218 = vmul.f32 %v186, %v186
        %v219 = vmul.f32 %v187, %v187
        %v220 = vmul.f32 %v188, %v188
        %v221 = vmul.f32 %v189, %v189
        %v222 = vmul.f32 %v190, %v190
        %v223 = vmul.f32 %v191, %v191
        %v224 = vmul.f32 %v192, %v192
        %v225 = vmul.f32 %v193, %v193
        %v226 = vmul.f32 %v194, %v194
        %v227 = vmul.f32 %v195, %v195
        %v228 = vmul.f32 %v196, %v196
        %v229 = vmul.f32 %v197, %v197
        %v230 = vmul.f32 %v198, %v198
        %v231 = vmul.f32 %v199, %v199
        %v232 = vmul.f32 %v200, %v200
        %v233 = vmul.f32 %v201, %v201
        %v234 = vmul.f32 %v202, %v202
        %v235 = vmul.f32 %v203, %v203
        %v236 = vmul.f32 %v204, %v204
        %v237 = vmul.f32 %v205, %v205
        %v238 = vmul.f32 %v206, %v206
        %v239 = vmul.f32 %v207, %v207
        %v240 = vmul.f32 %v208, %v208
        %v241 = vmul.f32 %v209, %v209
        %vm242 = vcmask 523264
        %v243 = vsel %vm242, %v210, 0.0
        %244 = vadd.xlane.f32.xlu0 %v243
        %v245 = vpop.xlane.xlu0 %244
        %v246 = vsel %vm242, %v211, 0.0
        %247 = vadd.xlane.f32.xlu0 %v246
        %v248 = vpop.xlane.xlu0 %247
        %v249 = vsel %vm242, %v212, 0.0
        %250 = vadd.xlane.f32.xlu0 %v249
        %v251 = vpop.xlane.xlu0 %250
        %v252 = vsel %vm242, %v213, 0.0
        %253 = vadd.xlane.f32.xlu0 %v252
        %v254 = vpop.xlane.xlu0 %253
        %v255 = vsel %vm242, %v214, 0.0
        %256 = vadd.xlane.f32.xlu0 %v255
        %v257 = vpop.xlane.xlu0 %256
        %v258 = vsel %vm242, %v215, 0.0
        %259 = vadd.xlane.f32.xlu0 %v258
        %v260 = vpop.xlane.xlu0 %259
        %v261 = vsel %vm242, %v216, 0.0
        %262 = vadd.xlane.f32.xlu0 %v261
        %v263 = vpop.xlane.xlu0 %262
        %v264 = vsel %vm242, %v217, 0.0
        %265 = vadd.xlane.f32.xlu0 %v264
        %v266 = vpop.xlane.xlu0 %265
        %v267 = vsel %vm242, %v218, 0.0
        %268 = vadd.xlane.f32.xlu0 %v267
        %v269 = vpop.xlane.xlu0 %268
        %v270 = vsel %vm242, %v219, 0.0
        %271 = vadd.xlane.f32.xlu0 %v270
        %v272 = vpop.xlane.xlu0 %271
        %v273 = vsel %vm242, %v220, 0.0
        %274 = vadd.xlane.f32.xlu0 %v273
        %v275 = vpop.xlane.xlu0 %274
        %v276 = vsel %vm242, %v221, 0.0
        %277 = vadd.xlane.f32.xlu0 %v276
        %v278 = vpop.xlane.xlu0 %277
        %v279 = vsel %vm242, %v222, 0.0
        %280 = vadd.xlane.f32.xlu0 %v279
        %v281 = vpop.xlane.xlu0 %280
        %v282 = vsel %vm242, %v223, 0.0
        %283 = vadd.xlane.f32.xlu0 %v282
        %v284 = vpop.xlane.xlu0 %283
        %v285 = vsel %vm242, %v224, 0.0
        %286 = vadd.xlane.f32.xlu0 %v285
        %v287 = vpop.xlane.xlu0 %286
        %v288 = vsel %vm242, %v225, 0.0
        %289 = vadd.xlane.f32.xlu0 %v288
        %v290 = vpop.xlane.xlu0 %289
        %v291 = vsel %vm242, %v226, 0.0
        %292 = vadd.xlane.f32.xlu0 %v291
        %v293 = vpop.xlane.xlu0 %292
        %v294 = vsel %vm242, %v227, 0.0
        %295 = vadd.xlane.f32.xlu0 %v294
        %v296 = vpop.xlane.xlu0 %295
        %v297 = vsel %vm242, %v228, 0.0
        %298 = vadd.xlane.f32.xlu0 %v297
        %v299 = vpop.xlane.xlu0 %298
        %v300 = vsel %vm242, %v229, 0.0
        %301 = vadd.xlane.f32.xlu0 %v300
        %v302 = vpop.xlane.xlu0 %301
        %v303 = vsel %vm242, %v230, 0.0
        %304 = vadd.xlane.f32.xlu0 %v303
        %v305 = vpop.xlane.xlu0 %304
        %v306 = vsel %vm242, %v231, 0.0
        %307 = vadd.xlane.f32.xlu0 %v306
        %v308 = vpop.xlane.xlu0 %307
        %v309 = vsel %vm242, %v232, 0.0
        %310 = vadd.xlane.f32.xlu0 %v309
        %v311 = vpop.xlane.xlu0 %310
        %v312 = vsel %vm242, %v233, 0.0
        %313 = vadd.xlane.f32.xlu0 %v312
        %v314 = vpop.xlane.xlu0 %313
        %v315 = vsel %vm242, %v234, 0.0
        %316 = vadd.xlane.f32.xlu0 %v315
        %v317 = vpop.xlane.xlu0 %316
        %v318 = vsel %vm242, %v235, 0.0
        %319 = vadd.xlane.f32.xlu0 %v318
        %v320 = vpop.xlane.xlu0 %319
        %v321 = vsel %vm242, %v236, 0.0
        %322 = vadd.xlane.f32.xlu0 %v321
        %v323 = vpop.xlane.xlu0 %322
        %v324 = vsel %vm242, %v237, 0.0
        %325 = vadd.xlane.f32.xlu0 %v324
        %v326 = vpop.xlane.xlu0 %325
        %v327 = vsel %vm242, %v238, 0.0
        %328 = vadd.xlane.f32.xlu0 %v327
        %v329 = vpop.xlane.xlu0 %328
        %v330 = vsel %vm242, %v239, 0.0
        %331 = vadd.xlane.f32.xlu0 %v330
        %v332 = vpop.xlane.xlu0 %331
        %v333 = vsel %vm242, %v240, 0.0
        %334 = vadd.xlane.f32.xlu0 %v333
        %v335 = vpop.xlane.xlu0 %334
        %v336 = vsel %vm242, %v241, 0.0
        %337 = vadd.xlane.f32.xlu0 %v336
        %v338 = vpop.xlane.xlu0 %337
        %v339 = vmax.f32 %v245, 1e-24
        %v340 = vmax.f32 %v248, 1e-24
        %v341 = vmax.f32 %v251, 1e-24
        %v342 = vmax.f32 %v254, 1e-24
        %v343 = vmax.f32 %v257, 1e-24
        %v344 = vmax.f32 %v260, 1e-24
        %v345 = vmax.f32 %v263, 1e-24
        %v346 = vmax.f32 %v266, 1e-24
        %v347 = vmax.f32 %v269, 1e-24
        %v348 = vmax.f32 %v272, 1e-24
        %v349 = vmax.f32 %v275, 1e-24
        %v350 = vmax.f32 %v278, 1e-24
        %v351 = vmax.f32 %v281, 1e-24
        %v352 = vmax.f32 %v284, 1e-24
        %v353 = vmax.f32 %v287, 1e-24
        %v354 = vmax.f32 %v290, 1e-24
        %v355 = vmax.f32 %v293, 1e-24
        %v356 = vmax.f32 %v296, 1e-24
        %v357 = vmax.f32 %v299, 1e-24
        %v358 = vmax.f32 %v302, 1e-24
        %v359 = vmax.f32 %v305, 1e-24
        %v360 = vmax.f32 %v308, 1e-24
        %v361 = vmax.f32 %v311, 1e-24
        %v362 = vmax.f32 %v314, 1e-24
        %v363 = vmax.f32 %v317, 1e-24
        %v364 = vmax.f32 %v320, 1e-24
        %v365 = vmax.f32 %v323, 1e-24
        %v366 = vmax.f32 %v326, 1e-24
        %v367 = vmax.f32 %v329, 1e-24
        %v368 = vmax.f32 %v332, 1e-24
        %v369 = vmax.f32 %v335, 1e-24
        %v370 = vmax.f32 %v338, 1e-24
        %v371 = vrsqrt.pop %v339
        %v372 = vrsqrt.pop %v340
        %v373 = vrsqrt.pop %v341
        %v374 = vrsqrt.pop %v342
        %v375 = vrsqrt.pop %v343
        %v376 = vrsqrt.pop %v344
        %v377 = vrsqrt.pop %v345
        %v378 = vrsqrt.pop %v346
        %v379 = vrsqrt.pop %v347
        %v380 = vrsqrt.pop %v348
        %v381 = vrsqrt.pop %v349
        %v382 = vrsqrt.pop %v350
        %v383 = vrsqrt.pop %v351
        %v384 = vrsqrt.pop %v352
        %v385 = vrsqrt.pop %v353
        %v386 = vrsqrt.pop %v354
        %v387 = vrsqrt.pop %v355
        %v388 = vrsqrt.pop %v356
        %v389 = vrsqrt.pop %v357
        %v390 = vrsqrt.pop %v358
        %v391 = vrsqrt.pop %v359
        %v392 = vrsqrt.pop %v360
        %v393 = vrsqrt.pop %v361
        %v394 = vrsqrt.pop %v362
        %v395 = vrsqrt.pop %v363
        %v396 = vrsqrt.pop %v364
        %v397 = vrsqrt.pop %v365
        %v398 = vrsqrt.pop %v366
        %v399 = vrsqrt.pop %v367
        %v400 = vrsqrt.pop %v368
        %v401 = vrsqrt.pop %v369
        %v402 = vrsqrt.pop %v370
        %v403 = vmul.f32 %v178, %v371
        %v404 = vmul.f32 %v179, %v372
        %v405 = vmul.f32 %v180, %v373
        %v406 = vmul.f32 %v181, %v374
        %v407 = vmul.f32 %v182, %v375
        %v408 = vmul.f32 %v183, %v376
        %v409 = vmul.f32 %v184, %v377
        %v410 = vmul.f32 %v185, %v378
        %v411 = vmul.f32 %v186, %v379
        %v412 = vmul.f32 %v187, %v380
        %v413 = vmul.f32 %v188, %v381
        %v414 = vmul.f32 %v189, %v382
        %v415 = vmul.f32 %v190, %v383
        %v416 = vmul.f32 %v191, %v384
        %v417 = vmul.f32 %v192, %v385
        %v418 = vmul.f32 %v193, %v386
        %v419 = vmul.f32 %v194, %v387
        %v420 = vmul.f32 %v195, %v388
        %v421 = vmul.f32 %v196, %v389
        %v422 = vmul.f32 %v197, %v390
        %v423 = vmul.f32 %v198, %v391
        %v424 = vmul.f32 %v199, %v392
        %v425 = vmul.f32 %v200, %v393
        %v426 = vmul.f32 %v201, %v394
        %v427 = vmul.f32 %v202, %v395
        %v428 = vmul.f32 %v203, %v396
        %v429 = vmul.f32 %v204, %v397
        %v430 = vmul.f32 %v205, %v398
        %v431 = vmul.f32 %v206, %v399
        %v432 = vmul.f32 %v207, %v400
        %v433 = vmul.f32 %v208, %v401
        %v434 = vmul.f32 %v209, %v402
        %v435 = vpack.c.bf16 %v404, %v403
        %v436 = vpack.c.bf16 %v406, %v405
        %v437 = vpack.c.bf16 %v408, %v407
        %v438 = vpack.c.bf16 %v410, %v409
        %v439 = vpack.c.bf16 %v412, %v411
        %v440 = vpack.c.bf16 %v414, %v413
        %v441 = vpack.c.bf16 %v416, %v415
        %v442 = vpack.c.bf16 %v418, %v417
        %v443 = vpack.c.bf16 %v420, %v419
        %v444 = vpack.c.bf16 %v422, %v421
        %v445 = vpack.c.bf16 %v424, %v423
        %v446 = vpack.c.bf16 %v426, %v425
        %v447 = vpack.c.bf16 %v428, %v427
        %v448 = vpack.c.bf16 %v430, %v429
        %v449 = vpack.c.bf16 %v432, %v431
        %v450 = vpack.c.bf16 %v434, %v433
        %v451 = vld [vmem:[%s0] sm:$0xf]
        %v453 = vsel %vm242, %v451, 0
        %v456 = vsel %vm242, %v435, 0
        %v459 = vsel %vm242, %v436, 0
        %v462 = vsel %vm242, %v437, 0
        %v465 = vsel %vm242, %v438, 0
        %v468 = vsel %vm242, %v439, 0
        %v471 = vsel %vm242, %v440, 0
        %v474 = vsel %vm242, %v441, 0
        %v477 = vsel %vm242, %v442, 0
        %v480 = vsel %vm242, %v443, 0
        %v483 = vsel %vm242, %v444, 0
        %v486 = vsel %vm242, %v445, 0
        %v489 = vsel %vm242, %v446, 0
        %v492 = vsel %vm242, %v447, 0
        %v495 = vsel %vm242, %v448, 0
        %v498 = vsel %vm242, %v449, 0
        %v501 = vsel %vm242, %v450, 0
        %503 = vmatprep.subr.bf16.mxu0 0
        %504 = vmatpush1.bf16.xpose.msra.mxu0 %v456
        %505 = vmatprep.subr.bf16.mxu0 0
        %506 = vmatpush1.bf16.xpose.msra.mxu0 %v459
        %507 = vmatprep.subr.bf16.mxu0 0
        %508 = vmatpush1.bf16.xpose.msra.mxu0 %v462
        %509 = vmatprep.subr.bf16.mxu0 0
        %510 = vmatpush1.bf16.xpose.msra.mxu0 %v465
        %511 = vmatprep.subr.bf16.mxu0 0
        %512 = vmatpush1.bf16.xpose.msra.mxu0 %v468
        %513 = vmatprep.subr.bf16.mxu0 0
        %514 = vmatpush1.bf16.xpose.msra.mxu0 %v471
        %515 = vmatprep.subr.bf16.mxu0 0
        %516 = vmatpush1.bf16.xpose.msra.mxu0 %v474
        %517 = vmatprep.subr.bf16.mxu0 0
        %518 = vmatpush1.bf16.xpose.msra.mxu0 %v477
        %519 = vmatprep.subr.bf16.mxu0 0
        %520 = vmatpush1.bf16.xpose.msra.mxu0 %v480
        %521 = vmatprep.subr.bf16.mxu0 0
        %522 = vmatpush1.bf16.xpose.msra.mxu0 %v483
        %523 = vmatprep.subr.bf16.mxu0 0
        %524 = vmatpush1.bf16.xpose.msra.mxu0 %v486
        %525 = vmatprep.subr.bf16.mxu0 0
        %526 = vmatpush1.bf16.xpose.msra.mxu0 %v489
        %527 = vmatprep.subr.bf16.mxu0 0
        %528 = vmatpush1.bf16.xpose.msra.mxu0 %v492
        %529 = vmatprep.subr.bf16.mxu0 0
        %530 = vmatpush1.bf16.xpose.msra.mxu0 %v495
        %531 = vmatprep.subr.bf16.mxu0 0
        %532 = vmatpush1.bf16.xpose.msra.mxu0 %v498
        %533 = vmatprep.subr.bf16.mxu0 0
        %534 = vmatpush1.bf16.xpose.msra.mxu0 %v501
        %535 = vmatprep.mubr.bf16.mxu0 0
        %536 = vmatmul.mubr.bf16.gmra.mrb[0].mxu0 %v453
        %v537 = vpop.f32.mrb[0].mxu0
        %v538 = vadd.f32 0.0, %v537
        %v539 = vpop.f32.mrb[0].mxu0
        %v540 = vadd.f32 0.0, %v539
        %v541 = vpop.f32.mrb[0].mxu0
        %v542 = vpop.f32.mrb[0].mxu0
        %543 = vdwg.mxu0
        %544 = vst [vmem:[%s137] sm:$0xff] %v538
        %545 = vst [vmem:[%s137 + $0x8] sm:$0xff] %v540
        %s546 = sand.u32 %s71, 1
        %s547 = scalar_lea.sflag [#allocation3], %s546
        %s548 = sand.u32 %s71, 1
        %s549 = smul.addr %s548, 16
        %s550 = scalar_lea.vmem [#allocation2], %s549
        // Predicated region
        $region29: #{tpu_custom_call.1} parent=27 // pred_check
          %p551 = pneg %p81
        $region30: #{tpu_custom_call.1} parent=27 // pred_check_branch
          %553 = sbr.rel (%p551) target = $region32
        $region31: #{tpu_custom_call.1} parent=27 // pred_region
          %s554 = smul.u32 2, %s16
          %s556 = ssub.s32 256, 256
          %557 = vsyncadd %s547, %s556
          %s558 = smul.addr %s554, 128
          %s559 = scalar_lea.hbm %s2, %s558
          %s561 = sshll.u32 %s550, 4
          %s562 = int_to_ptr.vmem [resolvable:$true] %s561
          %564 = dma.vmem_to_hbm [thread:$0]  %s562, 256, %s559, %s547
        $region32: #{tpu_custom_call.1} parent=27 // pred_fallthru
          _
      $region28: #{tpu_custom_call.1} parent=5 // pred_fallthru
        _
      %p565 = scmp.le.s32.totalorder 2, %s11
      // Predicated region
      $region33: #{tpu_custom_call.1} parent=5 // pred_check
        %p566 = pneg %p565
      $region34: #{tpu_custom_call.1} parent=5 // pred_check_branch
        %568 = sbr.rel (%p566) target = $region36
      $region35: #{tpu_custom_call.1} parent=5 // pred_region
        %s569 = ssub.s32 %s11, 2
        // Predicated region
        $region37: #{tpu_custom_call.1} parent=35 // pred_check
          %p570 = pneg %p87
        $region38: #{tpu_custom_call.1} parent=35 // pred_check_branch
          %572 = sbr.rel (%p570) target = $region40
        $region39: #{tpu_custom_call.1} parent=35 // pred_region
          %s573 = sand.u32 %s72, 1
          %s574 = scalar_lea.sflag [#allocation3], %s573
          %s575 = sand.u32 %s72, 1
          %s576 = smul.addr %s575, 16
          %s577 = scalar_lea.vmem [#allocation2], %s576
          %578 = dma.done %s574, 256
        $region40: #{tpu_custom_call.1} parent=35 // pred_fallthru
          _
      $region36: #{tpu_custom_call.1} parent=5 // pred_fallthru
        _
    $region6: #{tpu_custom_call.1} parent=1 // loop_footer
      %s15 = sadd.s32 1, %s11
    $region7: #{tpu_custom_call.1} parent=1 // loop_footer_branch
      %10 = sbr.rel target = $region3
    $region8: #{tpu_custom_call.1} parent=1 // loop_exit
      _
    %579 = vsyncpa [#allocation3], 1
    %s580 = scalar_lea.sflag [#allocation3], 1
    %581 = vsyncpa %s580, 1

</llo_original>
